<compile_context>
chip_gen: v7x
topology: tpu7x:2x2x1
jax: 0.10.0
libtpu: 0.0.40
codegen_flags: <defaults>
</compile_context>

<pallas_src>
import functools

import jax
import jax.numpy as jnp
from jax.experimental import pallas as pl
from jax.experimental.pallas import tpu as pltpu


# ----------------------------------------------------------------------------
# Small helpers
# ----------------------------------------------------------------------------
def _cdiv(a, b):
    return (a + b - 1) // b


def _round_up(x, m):
    return _cdiv(x, m) * m


def _choose_tile(dim, unit, max_units, slack=1.125):
    """Tile = multiple of `unit`, <= max_units*unit.  Prefer the largest tile
    whose padded size is within `slack` of the minimum achievable padding."""
    cap = min(max_units, _cdiv(dim, unit))
    cands = [(_round_up(dim, u * unit), u * unit) for u in range(1, cap + 1)]
    min_pad = min(p for p, _ in cands)
    budget = int(min_pad * slack)
    return max(t for p, t in cands if p <= budget)


def _im2col(x, kh, kw, stride, pad):
    """x: (N, H, W, C) NHWC -> (N*OH*OW, kh*kw*C) patches (layout plumbing)."""
    n, h, w, c = x.shape
    xp = jnp.pad(x, ((0, 0), (pad, pad), (pad, pad), (0, 0)))
    oh = (h + 2 * pad - kh) // stride + 1
    ow = (w + 2 * pad - kw) // stride + 1
    cols = []
    for i in range(kh):
        for j in range(kw):
            cols.append(
                xp[:, i:i + stride * (oh - 1) + 1:stride,
                      j:j + stride * (ow - 1) + 1:stride, :]
            )
    patches = jnp.concatenate(cols, axis=-1)  # (N, OH, OW, kh*kw*C)
    return patches.reshape(n * oh * ow, kh * kw * c), oh, ow


def _pool_views(x, k, stride, pad, pad_value):
    """x: (N, H, W, C) -> (k*k, N*OH*OW, C) shifted views for pooling."""
    n, h, w, c = x.shape
    xp = jnp.pad(x, ((0, 0), (pad, pad), (pad, pad), (0, 0)),
                 constant_values=pad_value)
    oh = (h + 2 * pad - k) // stride + 1
    ow = (w + 2 * pad - k) // stride + 1
    views = []
    for i in range(k):
        for j in range(k):
            views.append(
                xp[:, i:i + stride * (oh - 1) + 1:stride,
                      j:j + stride * (ow - 1) + 1:stride, :]
            )
    return jnp.stack(views, axis=0).reshape(k * k, n * oh * ow, c), oh, ow


# ----------------------------------------------------------------------------
# Fused matmul kernel: out = act( A @ B * scale + shift (+ residual) )
#   A, B, residual in bf16; f32 accumulation in VMEM scratch.
# ----------------------------------------------------------------------------
def _fused_matmul_kernel(a_ref, b_ref, ss_ref, *rest, relu, has_residual):
    if has_residual:
        res_ref, o_ref, acc_ref = rest
    else:
        o_ref, acc_ref = rest
        res_ref = None

    k = pl.program_id(2)

    @pl.when(k == 0)
    def _():
        acc_ref[...] = jnp.zeros_like(acc_ref)

    acc_ref[...] += jnp.dot(a_ref[...], b_ref[...],
                            preferred_element_type=jnp.float32)

    @pl.when(k == pl.num_programs(2) - 1)
    def _():
        ss = ss_ref[...]                       # (2, tn): row0=scale, row1=shift
        y = acc_ref[...] * ss[0:1, :] + ss[1:2, :]
        if has_residual:
            y = y + res_ref[...].astype(jnp.float32)
        if relu:
            y = jnp.maximum(y, 0.0)
        o_ref[...] = y.astype(o_ref.dtype)


def fused_matmul(a, b, scale, shift, residual=None, relu=False,
                 out_dtype=jnp.bfloat16):
    """a: (M, K), b: (K, N), scale/shift: (N,), residual: (M, N) or None."""
    M, K = a.shape
    K2, N = b.shape
    assert K == K2

    tm = _choose_tile(M, 8, 32)      # <= 256 rows
    tk = _choose_tile(K, 128, 8)     # <= 1024
    tn = _choose_tile(N, 128, 4)     # <= 512
    Mp, Kp, Np = _round_up(M, tm), _round_up(K, tk), _round_up(N, tn)

    a_p = a.astype(jnp.bfloat16)
    if (Mp, Kp) != (M, K):
        a_p = jnp.pad(a_p, ((0, Mp - M), (0, Kp - K)))
    b_p = b.astype(jnp.bfloat16)
    if (Kp, Np) != (K, N):
        b_p = jnp.pad(b_p, ((0, Kp - K), (0, Np - N)))
    ss = jnp.stack([scale, shift]).astype(jnp.float32)   # (2, N)
    if Np != N:
        ss = jnp.pad(ss, ((0, 0), (0, Np - N)))

    in_specs = [
        pl.BlockSpec((tm, tk), lambda i, j, k: (i, k)),
        pl.BlockSpec((tk, tn), lambda i, j, k: (k, j)),
        pl.BlockSpec((2, tn), lambda i, j, k: (0, j)),
    ]
    args = [a_p, b_p, ss]

    has_residual = residual is not None
    if has_residual:
        res_p = residual.astype(jnp.bfloat16)
        if (Mp, Np) != (M, N):
            res_p = jnp.pad(res_p, ((0, Mp - M), (0, Np - N)))
        in_specs.append(pl.BlockSpec((tm, tn), lambda i, j, k: (i, j)))
        args.append(res_p)

    kernel = functools.partial(_fused_matmul_kernel, relu=relu,
                               has_residual=has_residual)

    out = pl.pallas_call(
        kernel,
        out_shape=jax.ShapeDtypeStruct((Mp, Np), out_dtype),
        grid_spec=pltpu.PrefetchScalarGridSpec(
            num_scalar_prefetch=0,
            grid=(Mp // tm, Np // tn, Kp // tk),
            in_specs=in_specs,
            out_specs=pl.BlockSpec((tm, tn), lambda i, j, k: (i, j)),
            scratch_shapes=[pltpu.VMEM((tm, tn), jnp.float32)],
        ),
        compiler_params=pltpu.CompilerParams(
            dimension_semantics=("parallel", "parallel", "arbitrary"),
        ),
    )(*args)
    if (Mp, Np) != (M, N):
        out = out[:M, :N]
    return out


def ref_fused_matmul(a, b, scale, shift, residual=None, relu=False,
                     out_dtype=jnp.bfloat16):
    y = jnp.dot(a.astype(jnp.bfloat16), b.astype(jnp.bfloat16),
                preferred_element_type=jnp.float32)
    y = y * scale[None, :].astype(jnp.float32) + shift[None, :].astype(jnp.float32)
    if residual is not None:
        y = y + residual.astype(jnp.bfloat16).astype(jnp.float32)
    if relu:
        y = jnp.maximum(y, 0.0)
    return y.astype(out_dtype)


# ----------------------------------------------------------------------------
# Pooling kernels (tiled, pipelined, lane-dense (rows, C) slabs)
# ----------------------------------------------------------------------------
def _max_reduce_kernel(x_ref, o_ref):
    o_ref[...] = jnp.max(x_ref[...], axis=0)


def pallas_maxpool(x, k, stride, pad):
    # TODO(synk): the k*k shifted views are still materialized by the wrapper;
    # an in-kernel window read of the padded activation would avoid the k*k
    # HBM expansion (only hit once, on the stem output).
    stacked, oh, ow = _pool_views(x, k, stride, pad, -jnp.inf)
    kk, rows, c = stacked.shape
    tr = _choose_tile(rows, 16, 64)          # <= 1024 rows per tile
    rows_p = _round_up(rows, tr)
    if rows_p != rows:
        stacked = jnp.pad(stacked, ((0, 0), (0, rows_p - rows), (0, 0)))
    out = pl.pallas_call(
        _max_reduce_kernel,
        out_shape=jax.ShapeDtypeStruct((rows_p, c), x.dtype),
        grid=(rows_p // tr,),
        in_specs=[pl.BlockSpec((kk, tr, c), lambda i: (0, i, 0))],
        out_specs=pl.BlockSpec((tr, c), lambda i: (i, 0)),
        compiler_params=pltpu.CompilerParams(
            dimension_semantics=("parallel",)),
    )(stacked)
    if rows_p != rows:
        out = out[:rows]
    return out.reshape(x.shape[0], oh, ow, c)


def ref_maxpool(x, k, stride, pad):
    stacked, oh, ow = _pool_views(x, k, stride, pad, -jnp.inf)
    return jnp.max(stacked, axis=0).reshape(x.shape[0], oh, ow, x.shape[3])


def _global_avgpool_kernel(x_ref, o_ref):
    hw = x_ref.shape[1]
    acc = jnp.sum(x_ref[...].astype(jnp.float32), axis=1)
    o_ref[...] = (acc * (1.0 / hw)).astype(o_ref.dtype)


def pallas_global_avgpool(x):
    n, h, w, c = x.shape
    hw = h * w
    x3 = x.reshape(n, hw, c)
    if n <= 8:
        bn, n_p = n, n
    else:
        bn = 8
        n_p = _round_up(n, 8)
        if n_p != n:
            x3 = jnp.pad(x3, ((0, n_p - n), (0, 0), (0, 0)))
    out = pl.pallas_call(
        _global_avgpool_kernel,
        out_shape=jax.ShapeDtypeStruct((n_p, c), x.dtype),
        grid=(n_p // bn,),
        in_specs=[pl.BlockSpec((bn, hw, c), lambda i: (i, 0, 0))],
        out_specs=pl.BlockSpec((bn, c), lambda i: (i, 0)),
        compiler_params=pltpu.CompilerParams(
            dimension_semantics=("parallel",)),
    )(x3)
    return out[:n]


def ref_global_avgpool(x):
    n, h, w, c = x.shape
    return jnp.mean(x.reshape(n, h * w, c).astype(jnp.float32),
                    axis=1).astype(x.dtype)


# ----------------------------------------------------------------------------
# ResNet parameters and forward
# ----------------------------------------------------------------------------
def init_params(key, task_info, num_block=(1, 1, 1, 1)):
    keys = iter(jax.random.split(key, 64))

    def conv_bn_params(cin, cout, kh, kw):
        w = jax.random.normal(next(keys), (kh, kw, cin, cout), jnp.float32)
        w = w * ((2.0 / (kh * kw * cin)) ** 0.5)
        # BN folded to per-channel affine (inference form), deterministically
        # perturbed so the fused epilogue is non-trivially exercised.
        scale = 1.0 + 0.1 * jax.random.normal(next(keys), (cout,), jnp.float32)
        shift = 0.05 * jax.random.normal(next(keys), (cout,), jnp.float32)
        return {"w": w.reshape(kh * kw * cin, cout), "scale": scale,
                "shift": shift, "kh": kh, "kw": kw}

    params = {"task_info": list(task_info)}
    params["stem"] = conv_bn_params(3, 64, 7, 7)

    in_ch = 64
    stages = []
    for out_ch, nb, stride in zip((64, 128, 256, 512), num_block, (1, 2, 2, 2)):
        blocks = []
        for s in [stride] + [1] * (nb - 1):
            blk = {
                "stride": s,
                "c1": conv_bn_params(in_ch, out_ch, 3, 3),
                "c2": conv_bn_params(out_ch, out_ch, 3, 3),
                "shortcut": (conv_bn_params(in_ch, out_ch, 1, 1)
                             if (s != 1 or in_ch != out_ch) else None),
            }
            blocks.append(blk)
            in_ch = out_ch  # BasicBlock expansion = 1
        stages.append(blocks)
    params["stages"] = stages

    heads = []
    for _t, n in task_info:
        w = 0.01 * jax.random.normal(next(keys), (512, n), jnp.float32)
        b = jnp.zeros((n,), jnp.float32)
        heads.append({"w": w, "b": b})
    params["heads"] = heads
    return params


def resnet_forward(x_nchw, params, use_pallas=True):
    if use_pallas:
        mm, mp, gap = fused_matmul, pallas_maxpool, pallas_global_avgpool
    else:
        mm, mp, gap = ref_fused_matmul, ref_maxpool, ref_global_avgpool

    def conv_bn(x, p, stride, pad, relu, residual=None):
        n = x.shape[0]
        patches, oh, ow = _im2col(x, p["kh"], p["kw"], stride, pad)
        res2d = None if residual is None else residual.reshape(n * oh * ow, -1)
        y = mm(patches, p["w"], p["scale"], p["shift"],
               residual=res2d, relu=relu)
        return y.reshape(n, oh, ow, -1)

    # NCHW -> NHWC (lane-dense channels-last layout), bf16 activations.
    x = jnp.transpose(x_nchw, (0, 2, 3, 1)).astype(jnp.bfloat16)

    # conv1 stem: conv7x7/2 + BN + ReLU + maxpool3x3/2
    x = conv_bn(x, params["stem"], stride=2, pad=3, relu=True)
    x = mp(x, 3, 2, 1)

    # conv2_x .. conv5_x (BasicBlocks)
    for stage in params["stages"]:
        for blk in stage:
            if blk["shortcut"] is not None:
                sc = conv_bn(x, blk["shortcut"], stride=blk["stride"],
                             pad=0, relu=False)
            else:
                sc = x
            h1 = conv_bn(x, blk["c1"], stride=blk["stride"], pad=1, relu=True)
            x = conv_bn(h1, blk["c2"], stride=1, pad=1, relu=True, residual=sc)

    # global average pool + merged multi-task linear heads (one matmul).
    feat = gap(x)
    task_info = params["task_info"]
    w_all = jnp.concatenate([params["heads"][t]["w"] for t, _ in task_info],
                            axis=1)
    b_all = jnp.concatenate([params["heads"][t]["b"] for t, _ in task_info],
                            axis=0)
    scale_all = jnp.ones_like(b_all)
    y_all = mm(feat, w_all, scale_all, b_all, residual=None, relu=False,
               out_dtype=jnp.float32)
    outs, off = [], 0
    for _t, ncls in task_info:
        outs.append(y_all[:, off:off + ncls])
        off += ncls
    return outs


# ----------------------------------------------------------------------------
# Driver
# ----------------------------------------------------------------------------
if __name__ == "__main__":
    key = jax.random.PRNGKey(0)
    k_x, k_p = jax.random.split(key)

    N, C, H, W = 2, 3, 16, 16
    task_info = [(0, 10), (1, 5)]

    x = jax.random.normal(k_x, (N, C, H, W), dtype=jnp.float32)
    params = init_params(k_p, task_info, num_block=(1, 1, 1, 1))

    outs = resnet_forward(x, params, use_pallas=True)
    outs = jax.block_until_ready(outs)

    refs = resnet_forward(x, params, use_pallas=False)
    refs = jax.block_until_ready(refs)

    for o, r, (_t, ncls) in zip(outs, refs, task_info):
        assert o.shape == (N, ncls), (o.shape, (N, ncls))
        max_diff = float(jnp.max(jnp.abs(o - r)))
        assert jnp.allclose(o, r, atol=2e-2, rtol=2e-2), f"max diff {max_diff}"

    print("KERNEL_OK")
</pallas_src>

<mosaic_0001>
module attributes {stable_mosaic.version = 11 : i64} {
  func.func @_fused_matmul_kernel(%arg0: i32, %arg1: i32, %arg2: i32, %arg3: memref<128x256xbf16, #tpu.memory_space<vmem>>, %arg4: memref<256x128xbf16, #tpu.memory_space<vmem>>, %arg5: memref<2x128xf32, #tpu.memory_space<vmem>>, %arg6: memref<128x128xbf16, #tpu.memory_space<vmem>>, %arg7: memref<128x128xf32, #tpu.memory_space<vmem>>) attributes {dimension_semantics = [#tpu.dimension_semantics<parallel>, #tpu.dimension_semantics<parallel>, #tpu.dimension_semantics<arbitrary>], iteration_bounds = array<i64: 1, 1, 1>, scalar_prefetch = 0 : i64, scratch_operands = 1 : i64, tpu.core_type = #tpu.core_type<tc>, window_params = [{transform_indices = @transform_0, window_bounds = array<i64: 128, 256>}, {transform_indices = @transform_1, window_bounds = array<i64: 256, 128>}, {transform_indices = @transform_2, window_bounds = array<i64: 2, 128>}, {transform_indices = @transform_3, window_bounds = array<i64: 128, 128>}]} {
    %c0_i32 = arith.constant 0 : i32
    %0 = arith.cmpi eq, %arg2, %c0_i32 : i32
    %1 = arith.extui %0 : i1 to i32
    %c0_i32_0 = arith.constant 0 : i32
    %2 = arith.cmpi ne, %1, %c0_i32_0 : i32
    scf.if %2 {
      %cst_10 = arith.constant 0.000000e+00 : f32
      %12 = vector.broadcast %cst_10 : f32 to vector<128x128xf32>
      %c0_11 = arith.constant 0 : index
      %c0_12 = arith.constant 0 : index
      %13 = vector.load %arg7[%c0_11, %c0_12] : memref<128x128xf32, #tpu.memory_space<vmem>>, vector<128x128xf32>
      tpu.vector_store %arg7[%c0_11, %c0_12], %12 {strides = array<i32>} : memref<128x128xf32, #tpu.memory_space<vmem>>, vector<128x128xf32>,
    } else {
    }
    %c0 = arith.constant 0 : index
    %c0_1 = arith.constant 0 : index
    %3 = vector.load %arg7[%c0, %c0_1] : memref<128x128xf32, #tpu.memory_space<vmem>>, vector<128x128xf32>
    %c0_2 = arith.constant 0 : index
    %c0_3 = arith.constant 0 : index
    %4 = vector.load %arg3[%c0_2, %c0_3] : memref<128x256xbf16, #tpu.memory_space<vmem>>, vector<128x256xbf16>
    %c0_4 = arith.constant 0 : index
    %c0_5 = arith.constant 0 : index
    %5 = vector.load %arg4[%c0_4, %c0_5] : memref<256x128xbf16, #tpu.memory_space<vmem>>, vector<256x128xbf16>
    %cst = arith.constant dense<0.000000e+00> : vector<128x128xf32>
    %6 = tpu.matmul %4, %5, %cst {dimension_numbers = #tpu.dot_dimension_numbers<[1], [0], [0], [1], [0, 0, 1, 1], [], []>} : vector<128x256xbf16>, vector<256x128xbf16>, vector<128x128xf32> -> vector<128x128xf32>
    %7 = arith.addf %3, %6 : vector<128x128xf32>
    %c0_6 = arith.constant 0 : index
    %c0_7 = arith.constant 0 : index
    %8 = vector.load %arg7[%c0_6, %c0_7] : memref<128x128xf32, #tpu.memory_space<vmem>>, vector<128x128xf32>
    tpu.vector_store %arg7[%c0_6, %c0_7], %7 {strides = array<i32>} : memref<128x128xf32, #tpu.memory_space<vmem>>, vector<128x128xf32>,
    %c0_i32_8 = arith.constant 0 : i32
    %9 = arith.cmpi eq, %arg2, %c0_i32_8 : i32
    %10 = arith.extui %9 : i1 to i32
    %c0_i32_9 = arith.constant 0 : i32
    %11 = arith.cmpi ne, %10, %c0_i32_9 : i32
    scf.if %11 {
      %c0_10 = arith.constant 0 : index
      %c0_11 = arith.constant 0 : index
      %12 = vector.load %arg5[%c0_10, %c0_11] : memref<2x128xf32, #tpu.memory_space<vmem>>, vector<2x128xf32>
      %c0_12 = arith.constant 0 : index
      %c0_13 = arith.constant 0 : index
      %13 = vector.load %arg7[%c0_12, %c0_13] : memref<128x128xf32, #tpu.memory_space<vmem>>, vector<128x128xf32>
      %14 = vector.extract_strided_slice %12 {offsets = [0, 0], sizes = [1, 128], strides = [1, 1]} : vector<2x128xf32> to vector<1x128xf32>
      %15 = vector.broadcast %14 : vector<1x128xf32> to vector<128x128xf32>
      %16 = arith.mulf %13, %15 : vector<128x128xf32>
      %17 = vector.extract_strided_slice %12 {offsets = [1, 0], sizes = [1, 128], strides = [1, 1]} : vector<2x128xf32> to vector<1x128xf32>
      %18 = vector.broadcast %17 : vector<1x128xf32> to vector<128x128xf32>
      %19 = arith.addf %16, %18 : vector<128x128xf32>
      %cst_14 = arith.constant 0.000000e+00 : f32
      %20 = vector.broadcast %cst_14 : f32 to vector<128x128xf32>
      %21 = arith.maximumf %19, %20 : vector<128x128xf32>
      %22 = arith.truncf %21 : vector<128x128xf32> to vector<128x128xbf16>
      %c0_15 = arith.constant 0 : index
      %c0_16 = arith.constant 0 : index
      %23 = vector.load %arg6[%c0_15, %c0_16] : memref<128x128xbf16, #tpu.memory_space<vmem>>, vector<128x128xbf16>
      tpu.vector_store %arg6[%c0_15, %c0_16], %22 {strides = array<i32>} : memref<128x128xbf16, #tpu.memory_space<vmem>>, vector<128x128xbf16>,
    } else {
    }
    return
  }
  func.func @transform_0(%arg0: i32, %arg1: i32, %arg2: i32) -> (i32, i32) {
    %c0_i32 = arith.constant 0 : i32
    return %arg0, %arg2 : i32, i32
  }
  func.func @transform_1(%arg0: i32, %arg1: i32, %arg2: i32) -> (i32, i32) {
    %c0_i32 = arith.constant 0 : i32
    return %arg2, %arg1 : i32, i32
  }
  func.func @transform_2(%arg0: i32, %arg1: i32, %arg2: i32) -> (i32, i32) {
    %c0_i32 = arith.constant 0 : i32
    %c0_i32_0 = arith.constant 0 : i32
    return %c0_i32, %arg1 : i32, i32
  }
  func.func @transform_3(%arg0: i32, %arg1: i32, %arg2: i32) -> (i32, i32) {
    %c0_i32 = arith.constant 0 : i32
    return %arg0, %arg1 : i32, i32
  }
}

</mosaic_0001>

<llo_original>
// kernel: tpu_custom_call.1
$region0: #{tpu_custom_call.1}
  #allocation0 [shape = 'u32[]', space=smem, size = 0x4, offset = 0x4, fixed_abs, tag = 'smem constant byte address 0x4 - core index']
  #allocation1 [shape = 'u32[144,128]{1,0:T(1,128)}', space=vmem, size = 0x12000, scoped, tag = 'internal scratch']
  #allocation2 [shape = 'f32[128,128]{1,0:T(8,128)}', space=vmem, size = 0x10000, scoped, tag = 'scratch operand']
  %s0 = inlined_call_operand.hbm [shape: bf16[128,256], index: 0, kind: input, shape index: {}]
  %s1 = inlined_call_operand.hbm [shape: bf16[256,128], index: 1, kind: input, shape index: {}]
  %s2 = inlined_call_operand.vmem [shape: f32[2,128], index: 2, kind: input, shape index: {}]
  %s3 = inlined_call_operand.hbm [shape: bf16[128,128], index: 3, kind: output, shape index: {}]
  %s4 = sld [smem:[#allocation0]]
  $region38: #{tpu_custom_call.1} parent=0
    _
  %s6 = ssub.s32 1, %s4
  %s7 = scalar_select 0, %s6, %s4
  $region1: #{tpu_custom_call.1} parent=0
    #allocation3 [shape = 'u8[65536]{0}', space=vmem, size = 0x10000, scoped, tag = 'input window, operand 0, single buffered']
    #allocation4 [shape = 's32[1]{0}', space=sflag, size = 0x4, scoped, tag = 'scoped memory for tpu_custom_call.1']
    #allocation5 [shape = 's32[1]{0}', space=sflag, size = 0x4, scoped, tag = 'scoped memory for tpu_custom_call.1']
    #allocation6 [shape = 'u8[65536]{0}', space=vmem, size = 0x10000, scoped, tag = 'input window, operand 1, single buffered']
    #allocation7 [shape = 's32[1]{0}', space=sflag, size = 0x4, scoped, tag = 'scoped memory for tpu_custom_call.1']
    #allocation8 [shape = 'u8[32768]{0}', space=vmem, size = 0x8000, scoped, tag = 'output window, operand 0, single buffered']
    %8 = vsyncpa [#allocation4], 0
    %9 = vsyncpa [#allocation7], 0
    %10 = vsyncpa [#allocation5], 0
    // Predicated region
    $region2: #{tpu_custom_call.1} parent=1 // pred_check
      _
    $region3: #{tpu_custom_call.1} parent=1 // pred_check_branch
      %12 = sbr.rel (0) target = $region5
    $region4: #{tpu_custom_call.1} parent=1 // pred_region
      %s14 = ssub.s32 2048, 2048
      %15 = vsyncadd [#allocation4], %s14
      %s16 = sshll.u32 [#allocation3], 4
      %s17 = int_to_ptr.vmem [resolvable:$true] %s16
      %22 = dma.hbm_to_vmem [thread:$0]  %s0, 2048, %s17, [#allocation4], 128, 128, 8
    $region5: #{tpu_custom_call.1} parent=1 // pred_fallthru
      _
    // Predicated region
    $region6: #{tpu_custom_call.1} parent=1 // pred_check
      _
    $region7: #{tpu_custom_call.1} parent=1 // pred_check_branch
      %24 = sbr.rel (0) target = $region9
    $region8: #{tpu_custom_call.1} parent=1 // pred_region
      %s26 = ssub.s32 2048, 2048
      %27 = vsyncadd [#allocation7], %s26
      %s28 = sshll.u32 [#allocation6], 4
      %s29 = int_to_ptr.vmem [resolvable:$true] %s28
      %34 = dma.hbm_to_vmem [thread:$0]  %s1, 2048, %s29, [#allocation7], 64, 64, 4
    $region9: #{tpu_custom_call.1} parent=1 // pred_fallthru
      _
    // Predicated region
    $region10: #{tpu_custom_call.1} parent=1 // pred_check
      _
    $region11: #{tpu_custom_call.1} parent=1 // pred_check_branch
      %36 = sbr.rel (0) target = $region13
    $region12: #{tpu_custom_call.1} parent=1 // pred_region
      _
    $region13: #{tpu_custom_call.1} parent=1 // pred_fallthru
      _
    // Predicated region
    $region14: #{tpu_custom_call.1} parent=1 // pred_check
      _
    $region15: #{tpu_custom_call.1} parent=1 // pred_check_branch
      %38 = sbr.rel (0) target = $region17
    $region16: #{tpu_custom_call.1} parent=1 // pred_region
      %39 = dma.done [#allocation4], 2048
    $region17: #{tpu_custom_call.1} parent=1 // pred_fallthru
      _
    // Predicated region
    $region18: #{tpu_custom_call.1} parent=1 // pred_check
      _
    $region19: #{tpu_custom_call.1} parent=1 // pred_check_branch
      %41 = sbr.rel (0) target = $region21
    $region20: #{tpu_custom_call.1} parent=1 // pred_region
      %42 = dma.done [#allocation7], 2048
    $region21: #{tpu_custom_call.1} parent=1 // pred_fallthru
      _
    %p44 = scmp.eq.s32.totalorder 0, 0
    // Predicated region
    $region22: #{tpu_custom_call.1} parent=1 // pred_check
      %p45 = pneg %p44
    $region23: #{tpu_custom_call.1} parent=1 // pred_check_branch
      %47 = sbr.rel (%p45) target = $region25
    $region24: #{tpu_custom_call.1} parent=1 // pred_region
      %48 = vst [vmem:[#allocation2] sm:$0xff] 0.0
      %49 = vst [vmem:[#allocation2 + $0x8] sm:$0xff] 0.0
      %50 = vst [vmem:[#allocation2 + $0x10] sm:$0xff] 0.0
      %51 = vst [vmem:[#allocation2 + $0x18] sm:$0xff] 0.0
      %52 = vst [vmem:[#allocation2 + $0x20] sm:$0xff] 0.0
      %53 = vst [vmem:[#allocation2 + $0x28] sm:$0xff] 0.0
      %54 = vst [vmem:[#allocation2 + $0x30] sm:$0xff] 0.0
      %55 = vst [vmem:[#allocation2 + $0x38] sm:$0xff] 0.0
      %56 = vst [vmem:[#allocation2 + $0x40] sm:$0xff] 0.0
      %57 = vst [vmem:[#allocation2 + $0x48] sm:$0xff] 0.0
      %58 = vst [vmem:[#allocation2 + $0x50] sm:$0xff] 0.0
      %59 = vst [vmem:[#allocation2 + $0x58] sm:$0xff] 0.0
      %60 = vst [vmem:[#allocation2 + $0x60] sm:$0xff] 0.0
      %61 = vst [vmem:[#allocation2 + $0x68] sm:$0xff] 0.0
      %62 = vst [vmem:[#allocation2 + $0x70] sm:$0xff] 0.0
      %63 = vst [vmem:[#allocation2 + $0x78] sm:$0xff] 0.0
    $region25: #{tpu_custom_call.1} parent=1 // pred_fallthru
      _
    %v64 = vld [vmem:[#allocation2] sm:$0xff]
    %v65 = vld [vmem:[#allocation2 + $0x8] sm:$0xff]
    %v66 = vld [vmem:[#allocation2 + $0x10] sm:$0xff]
    %v67 = vld [vmem:[#allocation2 + $0x18] sm:$0xff]
    %v68 = vld [vmem:[#allocation2 + $0x20] sm:$0xff]
    %v69 = vld [vmem:[#allocation2 + $0x28] sm:$0xff]
    %v70 = vld [vmem:[#allocation2 + $0x30] sm:$0xff]
    %v71 = vld [vmem:[#allocation2 + $0x38] sm:$0xff]
    %v72 = vld [vmem:[#allocation2 + $0x40] sm:$0xff]
    %v73 = vld [vmem:[#allocation2 + $0x48] sm:$0xff]
    %v74 = vld [vmem:[#allocation2 + $0x50] sm:$0xff]
    %v75 = vld [vmem:[#allocation2 + $0x58] sm:$0xff]
    %v76 = vld [vmem:[#allocation2 + $0x60] sm:$0xff]
    %v77 = vld [vmem:[#allocation2 + $0x68] sm:$0xff]
    %v78 = vld [vmem:[#allocation2 + $0x70] sm:$0xff]
    %v79 = vld [vmem:[#allocation2 + $0x78] sm:$0xff]
    %v80 = vld [vmem:[#allocation3] sm:$0xff]
    %v81 = vld [vmem:[#allocation3 + $0x8] sm:$0xff]
    %v82 = vld [vmem:[#allocation3 + $0x10] sm:$0xff]
    %v83 = vld [vmem:[#allocation3 + $0x18] sm:$0xff]
    %v84 = vld [vmem:[#allocation3 + $0x20] sm:$0xff]
    %v85 = vld [vmem:[#allocation3 + $0x28] sm:$0xff]
    %v86 = vld [vmem:[#allocation3 + $0x30] sm:$0xff]
    %v87 = vld [vmem:[#allocation3 + $0x38] sm:$0xff]
    %v88 = vld [vmem:[#allocation3 + $0x40] sm:$0xff]
    %v89 = vld [vmem:[#allocation3 + $0x48] sm:$0xff]
    %v90 = vld [vmem:[#allocation3 + $0x50] sm:$0xff]
    %v91 = vld [vmem:[#allocation3 + $0x58] sm:$0xff]
    %v92 = vld [vmem:[#allocation3 + $0x60] sm:$0xff]
    %v93 = vld [vmem:[#allocation3 + $0x68] sm:$0xff]
    %v94 = vld [vmem:[#allocation3 + $0x70] sm:$0xff]
    %v95 = vld [vmem:[#allocation3 + $0x78] sm:$0xff]
    %v96 = vld [vmem:[#allocation6] sm:$0xf]
    %v97 = vld [vmem:[#allocation6 + $0x4] sm:$0xf]
    %v98 = vld [vmem:[#allocation6 + $0x8] sm:$0xf]
    %v99 = vld [vmem:[#allocation6 + $0xc] sm:$0xf]
    %v100 = vld [vmem:[#allocation6 + $0x10] sm:$0xf]
    %v101 = vld [vmem:[#allocation6 + $0x14] sm:$0xf]
    %v102 = vld [vmem:[#allocation6 + $0x18] sm:$0xf]
    %v103 = vld [vmem:[#allocation6 + $0x1c] sm:$0xf]
    %v104 = vld [vmem:[#allocation6 + $0x20] sm:$0xf]
    %v105 = vld [vmem:[#allocation6 + $0x24] sm:$0xf]
    %v106 = vld [vmem:[#allocation6 + $0x28] sm:$0xf]
    %v107 = vld [vmem:[#allocation6 + $0x2c] sm:$0xf]
    %v108 = vld [vmem:[#allocation6 + $0x30] sm:$0xf]
    %v109 = vld [vmem:[#allocation6 + $0x34] sm:$0xf]
    %v110 = vld [vmem:[#allocation6 + $0x38] sm:$0xf]
    %v111 = vld [vmem:[#allocation6 + $0x3c] sm:$0xf]
    %v112 = vld [vmem:[#allocation6 + $0x40] sm:$0xf]
    %v113 = vld [vmem:[#allocation6 + $0x44] sm:$0xf]
    %v114 = vld [vmem:[#allocation6 + $0x48] sm:$0xf]
    %v115 = vld [vmem:[#allocation6 + $0x4c] sm:$0xf]
    %v116 = vld [vmem:[#allocation6 + $0x50] sm:$0xf]
    %v117 = vld [vmem:[#allocation6 + $0x54] sm:$0xf]
    %v118 = vld [vmem:[#allocation6 + $0x58] sm:$0xf]
    %v119 = vld [vmem:[#allocation6 + $0x5c] sm:$0xf]
    %v120 = vld [vmem:[#allocation6 + $0x60] sm:$0xf]
    %v121 = vld [vmem:[#allocation6 + $0x64] sm:$0xf]
    %v122 = vld [vmem:[#allocation6 + $0x68] sm:$0xf]
    %v123 = vld [vmem:[#allocation6 + $0x6c] sm:$0xf]
    %v124 = vld [vmem:[#allocation6 + $0x70] sm:$0xf]
    %v125 = vld [vmem:[#allocation6 + $0x74] sm:$0xf]
    %v126 = vld [vmem:[#allocation6 + $0x78] sm:$0xf]
    %v127 = vld [vmem:[#allocation6 + $0x7c] sm:$0xf]
    %v144 = vunpack.c.l.b16 %v80
    %v145 = vunpack.c.h.b16 %v80
    %v146 = vunpack.c.l.b16 %v81
    %v147 = vunpack.c.h.b16 %v81
    %v148 = vunpack.c.l.b16 %v82
    %v149 = vunpack.c.h.b16 %v82
    %v150 = vunpack.c.l.b16 %v83
    %v151 = vunpack.c.h.b16 %v83
    %v152 = vunpack.c.l.b16 %v84
    %v153 = vunpack.c.h.b16 %v84
    %v154 = vunpack.c.l.b16 %v85
    %v155 = vunpack.c.h.b16 %v85
    %v156 = vunpack.c.l.b16 %v86
    %v157 = vunpack.c.h.b16 %v86
    %v158 = vunpack.c.l.b16 %v87
    %v159 = vunpack.c.h.b16 %v87
    %v160 = vunpack.c.l.b16 %v88
    %v161 = vunpack.c.h.b16 %v88
    %v162 = vunpack.c.l.b16 %v89
    %v163 = vunpack.c.h.b16 %v89
    %v164 = vunpack.c.l.b16 %v90
    %v165 = vunpack.c.h.b16 %v90
    %v166 = vunpack.c.l.b16 %v91
    %v167 = vunpack.c.h.b16 %v91
    %v168 = vunpack.c.l.b16 %v92
    %v169 = vunpack.c.h.b16 %v92
    %v170 = vunpack.c.l.b16 %v93
    %v171 = vunpack.c.h.b16 %v93
    %v172 = vunpack.c.l.b16 %v94
    %v173 = vunpack.c.h.b16 %v94
    %v174 = vunpack.c.l.b16 %v95
    %v175 = vunpack.c.h.b16 %v95
    %v176 = vpack.c.b16 %v146, %v144
    %v177 = vpack.c.b16 %v147, %v145
    %v178 = vpack.c.b16 %v150, %v148
    %v179 = vpack.c.b16 %v151, %v149
    %v180 = vpack.c.b16 %v154, %v152
    %v181 = vpack.c.b16 %v155, %v153
    %v182 = vpack.c.b16 %v158, %v156
    %v183 = vpack.c.b16 %v159, %v157
    %v184 = vpack.c.b16 %v162, %v160
    %v185 = vpack.c.b16 %v163, %v161
    %v186 = vpack.c.b16 %v166, %v164
    %v187 = vpack.c.b16 %v167, %v165
    %v188 = vpack.c.b16 %v170, %v168
    %v189 = vpack.c.b16 %v171, %v169
    %v190 = vpack.c.b16 %v174, %v172
    %v191 = vpack.c.b16 %v175, %v173
    %v240 = vunpack.c.l.b16 %v96
    %v241 = vunpack.c.l.b16 %v97
    %v242 = vunpack.c.l.b16 %v98
    %v243 = vunpack.c.l.b16 %v99
    %v244 = vunpack.c.l.b16 %v100
    %v245 = vunpack.c.l.b16 %v101
    %v246 = vunpack.c.l.b16 %v102
    %v247 = vunpack.c.l.b16 %v103
    %v248 = vunpack.c.l.b16 %v104
    %v249 = vunpack.c.l.b16 %v105
    %v250 = vunpack.c.l.b16 %v106
    %v251 = vunpack.c.l.b16 %v107
    %v252 = vunpack.c.l.b16 %v108
    %v253 = vunpack.c.l.b16 %v109
    %v254 = vunpack.c.l.b16 %v110
    %v255 = vunpack.c.l.b16 %v111
    %v256 = vunpack.c.l.b16 %v112
    %v257 = vunpack.c.l.b16 %v113
    %v258 = vunpack.c.l.b16 %v114
    %v259 = vunpack.c.l.b16 %v115
    %v260 = vunpack.c.l.b16 %v116
    %v261 = vunpack.c.l.b16 %v117
    %v262 = vunpack.c.l.b16 %v118
    %v263 = vunpack.c.l.b16 %v119
    %v264 = vunpack.c.l.b16 %v120
    %v265 = vunpack.c.l.b16 %v121
    %v266 = vunpack.c.l.b16 %v122
    %v267 = vunpack.c.l.b16 %v123
    %v268 = vunpack.c.l.b16 %v124
    %v269 = vunpack.c.l.b16 %v125
    %v270 = vunpack.c.l.b16 %v126
    %v271 = vunpack.c.l.b16 %v127
    %v272 = vpack.c.b16 %v241, %v240
    %v273 = vpack.c.b16 %v243, %v242
    %v274 = vpack.c.b16 %v245, %v244
    %v275 = vpack.c.b16 %v247, %v246
    %v276 = vpack.c.b16 %v249, %v248
    %v277 = vpack.c.b16 %v251, %v250
    %v278 = vpack.c.b16 %v253, %v252
    %v279 = vpack.c.b16 %v255, %v254
    %v280 = vpack.c.b16 %v257, %v256
    %v281 = vpack.c.b16 %v259, %v258
    %v282 = vpack.c.b16 %v261, %v260
    %v283 = vpack.c.b16 %v263, %v262
    %v284 = vpack.c.b16 %v265, %v264
    %v285 = vpack.c.b16 %v267, %v266
    %v286 = vpack.c.b16 %v269, %v268
    %v287 = vpack.c.b16 %v271, %v270
    %304 = vmatprep.subr.bf16.mxu0 0
    %305 = vmatpush1.bf16.msra.mxu0 %v272
    %306 = vmatprep.subr.bf16.mxu0 0
    %307 = vmatpush1.bf16.msra.mxu0 %v273
    %308 = vmatprep.subr.bf16.mxu0 0
    %309 = vmatpush1.bf16.msra.mxu0 %v274
    %310 = vmatprep.subr.bf16.mxu0 0
    %311 = vmatpush1.bf16.msra.mxu0 %v275
    %312 = vmatprep.subr.bf16.mxu0 0
    %313 = vmatpush1.bf16.msra.mxu0 %v276
    %314 = vmatprep.subr.bf16.mxu0 0
    %315 = vmatpush1.bf16.msra.mxu0 %v277
    %316 = vmatprep.subr.bf16.mxu0 0
    %317 = vmatpush1.bf16.msra.mxu0 %v278
    %318 = vmatprep.subr.bf16.mxu0 0
    %319 = vmatpush1.bf16.msra.mxu0 %v279
    %320 = vmatprep.subr.bf16.mxu0 0
    %321 = vmatpush1.bf16.msra.mxu0 %v280
    %322 = vmatprep.subr.bf16.mxu0 0
    %323 = vmatpush1.bf16.msra.mxu0 %v281
    %324 = vmatprep.subr.bf16.mxu0 0
    %325 = vmatpush1.bf16.msra.mxu0 %v282
    %326 = vmatprep.subr.bf16.mxu0 0
    %327 = vmatpush1.bf16.msra.mxu0 %v283
    %328 = vmatprep.subr.bf16.mxu0 0
    %329 = vmatpush1.bf16.msra.mxu0 %v284
    %330 = vmatprep.subr.bf16.mxu0 0
    %331 = vmatpush1.bf16.msra.mxu0 %v285
    %332 = vmatprep.subr.bf16.mxu0 0
    %333 = vmatpush1.bf16.msra.mxu0 %v286
    %334 = vmatprep.subr.bf16.mxu0 0
    %335 = vmatpush1.bf16.msra.mxu0 %v287
    %336 = vmatprep.mubr.bf16.mxu0 %v177
    %337 = vmatmul.mubr.bf16.gmra.mrb[0].mxu0 %v176
    %v338 = vpop.f32.mrb[0].mxu0
    %v339 = vadd.f32 0.0, %v338
    %v340 = vpop.f32.mrb[0].mxu0
    %v341 = vpop.f32.mrb[0].mxu0
    %v342 = vadd.f32 0.0, %v341
    %v343 = vpop.f32.mrb[0].mxu0
    %344 = vmatprep.mubr.bf16.mxu0 %v179
    %345 = vmatmul.mubr.bf16.gmra.mrb[0].mxu0 %v178
    %v346 = vpop.f32.mrb[0].mxu0
    %v347 = vadd.f32 0.0, %v346
    %v348 = vpop.f32.mrb[0].mxu0
    %v349 = vpop.f32.mrb[0].mxu0
    %v350 = vadd.f32 0.0, %v349
    %v351 = vpop.f32.mrb[0].mxu0
    %352 = vmatprep.mubr.bf16.mxu0 %v181
    %353 = vmatmul.mubr.bf16.gmra.mrb[0].mxu0 %v180
    %v354 = vpop.f32.mrb[0].mxu0
    %v355 = vadd.f32 0.0, %v354
    %v356 = vpop.f32.mrb[0].mxu0
    %v357 = vpop.f32.mrb[0].mxu0
    %v358 = vadd.f32 0.0, %v357
    %v359 = vpop.f32.mrb[0].mxu0
    %360 = vmatprep.mubr.bf16.mxu0 %v183
    %361 = vmatmul.mubr.bf16.gmra.mrb[0].mxu0 %v182
    %v362 = vpop.f32.mrb[0].mxu0
    %v363 = vadd.f32 0.0, %v362
    %v364 = vpop.f32.mrb[0].mxu0
    %v365 = vpop.f32.mrb[0].mxu0
    %v366 = vadd.f32 0.0, %v365
    %v367 = vpop.f32.mrb[0].mxu0
    %368 = vmatprep.mubr.bf16.mxu0 %v185
    %369 = vmatmul.mubr.bf16.gmra.mrb[0].mxu0 %v184
    %v370 = vpop.f32.mrb[0].mxu0
    %v371 = vadd.f32 0.0, %v370
    %v372 = vpop.f32.mrb[0].mxu0
    %v373 = vpop.f32.mrb[0].mxu0
    %v374 = vadd.f32 0.0, %v373
    %v375 = vpop.f32.mrb[0].mxu0
    %376 = vmatprep.mubr.bf16.mxu0 %v187
    %377 = vmatmul.mubr.bf16.gmra.mrb[0].mxu0 %v186
    %v378 = vpop.f32.mrb[0].mxu0
    %v379 = vadd.f32 0.0, %v378
    %v380 = vpop.f32.mrb[0].mxu0
    %v381 = vpop.f32.mrb[0].mxu0
    %v382 = vadd.f32 0.0, %v381
    %v383 = vpop.f32.mrb[0].mxu0
    %384 = vmatprep.mubr.bf16.mxu0 %v189
    %385 = vmatmul.mubr.bf16.gmra.mrb[0].mxu0 %v188
    %v386 = vpop.f32.mrb[0].mxu0
    %v387 = vadd.f32 0.0, %v386
    %v388 = vpop.f32.mrb[0].mxu0
    %v389 = vpop.f32.mrb[0].mxu0
    %v390 = vadd.f32 0.0, %v389
    %v391 = vpop.f32.mrb[0].mxu0
    %392 = vmatprep.mubr.bf16.mxu0 %v191
    %393 = vmatmul.mubr.bf16.gmra.mrb[0].mxu0 %v190
    %v394 = vpop.f32.mrb[0].mxu0
    %v395 = vadd.f32 0.0, %v394
    %v396 = vpop.f32.mrb[0].mxu0
    %v397 = vpop.f32.mrb[0].mxu0
    %v398 = vadd.f32 0.0, %v397
    %v399 = vpop.f32.mrb[0].mxu0
    %400 = vdwg.mxu0
    %v401 = vadd.f32 %v64, %v339
    %v402 = vadd.f32 %v65, %v342
    %v403 = vadd.f32 %v66, %v347
    %v404 = vadd.f32 %v67, %v350
    %v405 = vadd.f32 %v68, %v355
    %v406 = vadd.f32 %v69, %v358
    %v407 = vadd.f32 %v70, %v363
    %v408 = vadd.f32 %v71, %v366
    %v409 = vadd.f32 %v72, %v371
    %v410 = vadd.f32 %v73, %v374
    %v411 = vadd.f32 %v74, %v379
    %v412 = vadd.f32 %v75, %v382
    %v413 = vadd.f32 %v76, %v387
    %v414 = vadd.f32 %v77, %v390
    %v415 = vadd.f32 %v78, %v395
    %v416 = vadd.f32 %v79, %v398
    %417 = vst [vmem:[#allocation2] sm:$0xff] %v401
    %418 = vst [vmem:[#allocation2 + $0x8] sm:$0xff] %v402
    %419 = vst [vmem:[#allocation2 + $0x10] sm:$0xff] %v403
    %420 = vst [vmem:[#allocation2 + $0x18] sm:$0xff] %v404
    %421 = vst [vmem:[#allocation2 + $0x20] sm:$0xff] %v405
    %422 = vst [vmem:[#allocation2 + $0x28] sm:$0xff] %v406
    %423 = vst [vmem:[#allocation2 + $0x30] sm:$0xff] %v407
    %424 = vst [vmem:[#allocation2 + $0x38] sm:$0xff] %v408
    %425 = vst [vmem:[#allocation2 + $0x40] sm:$0xff] %v409
    %426 = vst [vmem:[#allocation2 + $0x48] sm:$0xff] %v410
    %427 = vst [vmem:[#allocation2 + $0x50] sm:$0xff] %v411
    %428 = vst [vmem:[#allocation2 + $0x58] sm:$0xff] %v412
    %429 = vst [vmem:[#allocation2 + $0x60] sm:$0xff] %v413
    %430 = vst [vmem:[#allocation2 + $0x68] sm:$0xff] %v414
    %431 = vst [vmem:[#allocation2 + $0x70] sm:$0xff] %v415
    %432 = vst [vmem:[#allocation2 + $0x78] sm:$0xff] %v416
    // Predicated region
    $region26: #{tpu_custom_call.1} parent=1 // pred_check
      %p433 = pneg %p44
    $region27: #{tpu_custom_call.1} parent=1 // pred_check_branch
      %435 = sbr.rel (%p433) target = $region29
    $region28: #{tpu_custom_call.1} parent=1 // pred_region
      %v436 = vld [vmem:[%s2] sm:$0x3]
      %v437 = vld [vmem:[#allocation2] sm:$0xff]
      %v438 = vld [vmem:[#allocation2 + $0x8] sm:$0xff]
      %v439 = vld [vmem:[#allocation2 + $0x10] sm:$0xff]
      %v440 = vld [vmem:[#allocation2 + $0x18] sm:$0xff]
      %v441 = vld [vmem:[#allocation2 + $0x20] sm:$0xff]
      %v442 = vld [vmem:[#allocation2 + $0x28] sm:$0xff]
      %v443 = vld [vmem:[#allocation2 + $0x30] sm:$0xff]
      %v444 = vld [vmem:[#allocation2 + $0x38] sm:$0xff]
      %v445 = vld [vmem:[#allocation2 + $0x40] sm:$0xff]
      %v446 = vld [vmem:[#allocation2 + $0x48] sm:$0xff]
      %v447 = vld [vmem:[#allocation2 + $0x50] sm:$0xff]
      %v448 = vld [vmem:[#allocation2 + $0x58] sm:$0xff]
      %v449 = vld [vmem:[#allocation2 + $0x60] sm:$0xff]
      %v450 = vld [vmem:[#allocation2 + $0x68] sm:$0xff]
      %v451 = vld [vmem:[#allocation2 + $0x70] sm:$0xff]
      %v452 = vld [vmem:[#allocation2 + $0x78] sm:$0xff]
      %v453 = vlaneseq
      %v454 = vshrl.u32 %v453, 7
      %v455 = vsub.s32 0, %v454
      %v456 = vrot.slane %v436, %v455
      %v457 = vmul.f32 %v437, %v456
      %v458 = vmul.f32 %v438, %v456
      %v459 = vmul.f32 %v439, %v456
      %v460 = vmul.f32 %v440, %v456
      %v461 = vmul.f32 %v441, %v456
      %v462 = vmul.f32 %v442, %v456
      %v463 = vmul.f32 %v443, %v456
      %v464 = vmul.f32 %v444, %v456
      %v465 = vmul.f32 %v445, %v456
      %v466 = vmul.f32 %v446, %v456
      %v467 = vmul.f32 %v447, %v456
      %v468 = vmul.f32 %v448, %v456
      %v469 = vmul.f32 %v449, %v456
      %v470 = vmul.f32 %v450, %v456
      %v471 = vmul.f32 %v451, %v456
      %v472 = vmul.f32 %v452, %v456
      %v473 = vlaneseq
      %v474 = vshrl.u32 %v473, 7
      %v475 = vsub.s32 1, %v474
      %v476 = vrot.slane %v436, %v475
      %v477 = vadd.f32 %v457, %v476
      %v478 = vadd.f32 %v458, %v476
      %v479 = vadd.f32 %v459, %v476
      %v480 = vadd.f32 %v460, %v476
      %v481 = vadd.f32 %v461, %v476
      %v482 = vadd.f32 %v462, %v476
      %v483 = vadd.f32 %v463, %v476
      %v484 = vadd.f32 %v464, %v476
      %v485 = vadd.f32 %v465, %v476
      %v486 = vadd.f32 %v466, %v476
      %v487 = vadd.f32 %v467, %v476
      %v488 = vadd.f32 %v468, %v476
      %v489 = vadd.f32 %v469, %v476
      %v490 = vadd.f32 %v470, %v476
      %v491 = vadd.f32 %v471, %v476
      %v492 = vadd.f32 %v472, %v476
      %v493 = vmax.f32 %v477, 0.0
      %v494 = vmax.f32 %v478, 0.0
      %v495 = vmax.f32 %v479, 0.0
      %v496 = vmax.f32 %v480, 0.0
      %v497 = vmax.f32 %v481, 0.0
      %v498 = vmax.f32 %v482, 0.0
      %v499 = vmax.f32 %v483, 0.0
      %v500 = vmax.f32 %v484, 0.0
      %v501 = vmax.f32 %v485, 0.0
      %v502 = vmax.f32 %v486, 0.0
      %v503 = vmax.f32 %v487, 0.0
      %v504 = vmax.f32 %v488, 0.0
      %v505 = vmax.f32 %v489, 0.0
      %v506 = vmax.f32 %v490, 0.0
      %v507 = vmax.f32 %v491, 0.0
      %v508 = vmax.f32 %v492, 0.0
      %v509 = vpack.c.bf16 %v494, %v493
      %v510 = vpack.c.bf16 %v496, %v495
      %v511 = vpack.c.bf16 %v498, %v497
      %v512 = vpack.c.bf16 %v500, %v499
      %v513 = vpack.c.bf16 %v502, %v501
      %v514 = vpack.c.bf16 %v504, %v503
      %v515 = vpack.c.bf16 %v506, %v505
      %v516 = vpack.c.bf16 %v508, %v507
      %v525 = vunpack.c.l.b16 %v509
      %v526 = vunpack.c.h.b16 %v509
      %v527 = vunpack.c.l.b16 %v510
      %v528 = vunpack.c.h.b16 %v510
      %v529 = vunpack.c.l.b16 %v511
      %v530 = vunpack.c.h.b16 %v511
      %v531 = vunpack.c.l.b16 %v512
      %v532 = vunpack.c.h.b16 %v512
      %v533 = vunpack.c.l.b16 %v513
      %v534 = vunpack.c.h.b16 %v513
      %v535 = vunpack.c.l.b16 %v514
      %v536 = vunpack.c.h.b16 %v514
      %v537 = vunpack.c.l.b16 %v515
      %v538 = vunpack.c.h.b16 %v515
      %v539 = vunpack.c.l.b16 %v516
      %v540 = vunpack.c.h.b16 %v516
      %v541 = vpack.c.b16 %v525, %v525
      %v542 = vpack.c.b16 %v526, %v526
      %v543 = vpack.c.b16 %v527, %v527
      %v544 = vpack.c.b16 %v528, %v528
      %v545 = vpack.c.b16 %v529, %v529
      %v546 = vpack.c.b16 %v530, %v530
      %v547 = vpack.c.b16 %v531, %v531
      %v548 = vpack.c.b16 %v532, %v532
      %v549 = vpack.c.b16 %v533, %v533
      %v550 = vpack.c.b16 %v534, %v534
      %v551 = vpack.c.b16 %v535, %v535
      %v552 = vpack.c.b16 %v536, %v536
      %v553 = vpack.c.b16 %v537, %v537
      %v554 = vpack.c.b16 %v538, %v538
      %v555 = vpack.c.b16 %v539, %v539
      %v556 = vpack.c.b16 %v540, %v540
      %573 = vst [vmem:[#allocation8] sm:$0xf] %v541
      %574 = vst [vmem:[#allocation8 + $0x4] sm:$0xf] %v542
      %575 = vst [vmem:[#allocation8 + $0x8] sm:$0xf] %v543
      %576 = vst [vmem:[#allocation8 + $0xc] sm:$0xf] %v544
      %577 = vst [vmem:[#allocation8 + $0x10] sm:$0xf] %v545
      %578 = vst [vmem:[#allocation8 + $0x14] sm:$0xf] %v546
      %579 = vst [vmem:[#allocation8 + $0x18] sm:$0xf] %v547
      %580 = vst [vmem:[#allocation8 + $0x1c] sm:$0xf] %v548
      %581 = vst [vmem:[#allocation8 + $0x20] sm:$0xf] %v549
      %582 = vst [vmem:[#allocation8 + $0x24] sm:$0xf] %v550
      %583 = vst [vmem:[#allocation8 + $0x28] sm:$0xf] %v551
      %584 = vst [vmem:[#allocation8 + $0x2c] sm:$0xf] %v552
      %585 = vst [vmem:[#allocation8 + $0x30] sm:$0xf] %v553
      %586 = vst [vmem:[#allocation8 + $0x34] sm:$0xf] %v554
      %587 = vst [vmem:[#allocation8 + $0x38] sm:$0xf] %v555
      %588 = vst [vmem:[#allocation8 + $0x3c] sm:$0xf] %v556
    $region29: #{tpu_custom_call.1} parent=1 // pred_fallthru
      _
    // Predicated region
    $region30: #{tpu_custom_call.1} parent=1 // pred_check
      _
    $region31: #{tpu_custom_call.1} parent=1 // pred_check_branch
      %590 = sbr.rel (0) target = $region33
    $region32: #{tpu_custom_call.1} parent=1 // pred_region
      %s592 = ssub.s32 1024, 1024
      %593 = vsyncadd [#allocation5], %s592
      %s594 = sshll.u32 [#allocation8], 4
      %s595 = int_to_ptr.vmem [resolvable:$true] %s594
      %600 = dma.vmem_to_hbm [thread:$0]  %s595, 1024, %s3, [#allocation5], 64, 64, 4
    $region33: #{tpu_custom_call.1} parent=1 // pred_fallthru
      _
    // Predicated region
    $region34: #{tpu_custom_call.1} parent=1 // pred_check
      _
    $region35: #{tpu_custom_call.1} parent=1 // pred_check_branch
      %602 = sbr.rel (0) target = $region37
    $region36: #{tpu_custom_call.1} parent=1 // pred_region
      %603 = dma.done [#allocation5], 1024
    $region37: #{tpu_custom_call.1} parent=1 // pred_fallthru
      _
    %604 = vsyncpa [#allocation4], 1
    %605 = vsyncpa [#allocation7], 1
    %606 = vsyncpa [#allocation5], 1

</llo_original>
